<compile_context>
chip_gen: v6e
topology: v6e:2x2x1
jax: 0.10.0
libtpu: 0.0.40
codegen_flags: <defaults>
</compile_context>

<pallas_src>
import jax
import jax.numpy as jnp
from jax.experimental import pallas as pl
from jax.experimental.pallas import tpu as pltpu


def _round_up(n, m):
    return ((n + m - 1) // m) * m


def _qfunction_kernel(obs_ref, act_ref, w1o_ref, w1a_ref, b1_ref,
                      w2_ref, b2_ref, w3_ref, b3_ref, out_ref):
    wdt = w1o_ref.dtype

    # Layer 1: fused concat -> split matmul on the MXU (bf16 in, f32 accumulate).
    h1 = (jnp.dot(obs_ref[...].astype(wdt), w1o_ref[...],
                  preferred_element_type=jnp.float32)
          + jnp.dot(act_ref[...].astype(wdt), w1a_ref[...],
                    preferred_element_type=jnp.float32)
          + b1_ref[...])
    h1 = jnp.maximum(h1, 0.0)                                   # ReLU (VPU)

    # Layer 2: MXU matmul + bias + ReLU (f32 accumulation).
    h2 = jnp.dot(h1.astype(w2_ref.dtype), w2_ref[...],
                 preferred_element_type=jnp.float32) + b2_ref[...]
    h2 = jnp.maximum(h2, 0.0)                                   # ReLU (VPU)

    # Layer 3 (out_features == 1): VPU multiply + XLU cross-lane reduce; store as
    # a lane-dense (1, TILE_B) row.
    q = jnp.sum(h2 * w3_ref[...], axis=-1, keepdims=True) + b3_ref[...]  # (TILE_B, 1)
    out_ref[...] = q.T.astype(out_ref.dtype)                    # (1, TILE_B)


def qfunction_forward(obs, action, params, *, tile_b_max=512):
    """Pallas forward pass of QFunction.

    obs:    [B, obs_dim] float32
    action: [B, action_dim] float32
    params: dict with
        w1_obs [obs_dim, H] bf16, w1_act [action_dim, H] bf16, b1 [1, H] f32,
        w2 [H, H] bf16, b2 [1, H] f32, w3 [1, H] f32, b3 [1, 1] f32
    returns [B, 1] float32
    """
    assert obs.shape[0] == action.shape[0]
    obs = obs.astype(jnp.float32)
    action = action.astype(jnp.float32)

    w1o, w1a, b1 = params["w1_obs"], params["w1_act"], params["b1"]
    w2, b2 = params["w2"], params["b2"]
    w3, b3 = params["w3"], params["b3"]

    B = obs.shape[0]
    obs_dim = obs.shape[1]
    act_dim = action.shape[1]
    hidden = w2.shape[0]

    # Batch tile: 512 for real workloads, never bigger than the sublane-aligned
    # batch.  When the batch is non-trivial, cap the tile so the grid has >= 2
    # steps and both v7x TensorCores get work under "parallel" semantics
    # (harmless extra ~0.35us step elsewhere).
    tile_b = min(tile_b_max, _round_up(B, 8))
    if B > 8:
        tile_b = min(tile_b, _round_up(-(-B // 2), 8))
    n_tiles = -(-B // tile_b)       # ragged last tile handled by Pallas, no jnp.pad

    # Scoped-VMEM budget: resident weights (x2 safety), double-buffered
    # activation/output tiles, f32 intermediates (h1/h2), plus headroom.
    nbytes = lambda a: a.size * a.dtype.itemsize
    weight_bytes = sum(nbytes(a) for a in (w1o, w1a, b1, w2, b2, w3, b3))
    est = (2 * weight_bytes
           + 2 * 2 * tile_b * (obs_dim + act_dim) * 4
           + 2 * 2 * tile_b * 4
           + 4 * tile_b * hidden * 4
           + (4 << 20))
    vmem_limit = int(min(max(est, 16 << 20), 64 << 20))   # 64 MiB = v7x physical VMEM

    # Activations: tiled along the batch axis.  Weights/biases: full-array blocks
    # with constant index_map -> VMEM-resident across all grid steps.
    act_spec = lambda d: pl.BlockSpec((tile_b, d), lambda i: (i, 0))
    resident = lambda a: pl.BlockSpec(a.shape, lambda i: (0, 0))

    q_rows = pl.pallas_call(
        _qfunction_kernel,
        out_shape=jax.ShapeDtypeStruct((n_tiles, tile_b), jnp.float32),
        grid=(n_tiles,),
        in_specs=[
            act_spec(obs_dim),     # obs
            act_spec(act_dim),     # action
            resident(w1o), resident(w1a), resident(b1),
            resident(w2), resident(b2),
            resident(w3), resident(b3),
        ],
        out_specs=pl.BlockSpec((1, tile_b), lambda i: (i, 0)),   # lane-dense rows
        compiler_params=pltpu.CompilerParams(
            dimension_semantics=("parallel",),
            vmem_limit_bytes=vmem_limit),
    )(obs, action, w1o, w1a, b1, w2, b2, w3, b3)

    # (n_tiles, tile_b) -> (B, 1); padded / ragged rows are dropped here.
    return q_rows.reshape(-1)[:B].reshape(B, 1)


def init_qfunction_params(key, obs_dim, action_dim, hidden_dim, *, pad_hidden_to=128):
    """PyTorch nn.Linear-style init (U[-1/sqrt(fan_in), +1/sqrt(fan_in)]).

    * w1 is stored pre-split (obs / action halves) and w3 as a [1, H] row so the
      kernel needs no concat/transpose glue at call time.
    * the hidden dim is zero-padded to a multiple of `pad_hidden_to`; results are
      bit-identical (padded columns stay at ReLU(0)=0 and padded w3 entries are 0)
      while every vreg / MXU column set is fully used.
    * matmul weights (w1_obs, w1_act, w2) are stored bf16 for the MXU; biases and
      the w3 reduction row stay f32.
    """
    d_in = obs_dim + action_dim
    k1, k2, k3, k4, k5, k6 = jax.random.split(key, 6)

    def lin(kw, kb, fan_in, fan_out):
        bound = 1.0 / jnp.sqrt(jnp.float32(fan_in))
        w = jax.random.uniform(kw, (fan_in, fan_out), jnp.float32, -bound, bound)
        b = jax.random.uniform(kb, (1, fan_out), jnp.float32, -bound, bound)
        return w, b

    w1, b1 = lin(k1, k2, d_in, hidden_dim)
    w2, b2 = lin(k3, k4, hidden_dim, hidden_dim)
    w3, b3 = lin(k5, k6, hidden_dim, 1)

    h_pad = _round_up(hidden_dim, pad_hidden_to)
    pad_c = ((0, 0), (0, h_pad - hidden_dim))    # pad output columns (lane dim)
    pad_r = ((0, h_pad - hidden_dim), (0, 0))    # pad input rows (contraction dim)
    w1 = jnp.pad(w1, pad_c)
    b1 = jnp.pad(b1, pad_c)
    w2 = jnp.pad(jnp.pad(w2, pad_c), pad_r)
    b2 = jnp.pad(b2, pad_c)
    w3 = jnp.pad(w3, pad_r)

    return {
        "w1_obs": w1[:obs_dim].astype(jnp.bfloat16),   # [obs_dim, H_pad]
        "w1_act": w1[obs_dim:].astype(jnp.bfloat16),   # [action_dim, H_pad]
        "b1": b1,                                      # [1, H_pad] f32
        "w2": w2.astype(jnp.bfloat16),                 # [H_pad, H_pad]
        "b2": b2,                                      # [1, H_pad] f32
        "w3": w3.T,                                    # [1, H_pad] f32 (VPU reduce row)
        "b3": b3,                                      # [1, 1] f32
    }


if __name__ == "__main__":
    obs_dim, action_dim, hidden_dim = 32, 8, 32
    batch = 2

    key = jax.random.PRNGKey(0)
    k_obs, k_act, k_params = jax.random.split(key, 3)

    obs = jax.random.normal(k_obs, (batch, obs_dim), jnp.float32)
    action = jax.random.normal(k_act, (batch, action_dim), jnp.float32)
    params = init_qfunction_params(k_params, obs_dim, action_dim, hidden_dim)

    q = jax.block_until_ready(qfunction_forward(obs, action, params))

    # Pure-JAX reference of the same math (bf16 MXU inputs, f32 accumulation),
    # equivalent to the PyTorch module up to the bf16 weight cast.
    f32 = jnp.float32
    h1 = jnp.maximum(
        jnp.dot(obs.astype(jnp.bfloat16), params["w1_obs"], preferred_element_type=f32)
        + jnp.dot(action.astype(jnp.bfloat16), params["w1_act"], preferred_element_type=f32)
        + params["b1"], 0.0)
    h2 = jnp.maximum(
        jnp.dot(h1.astype(jnp.bfloat16), params["w2"], preferred_element_type=f32)
        + params["b2"], 0.0)
    q_ref = h2 @ params["w3"].T + params["b3"]

    assert q.shape == (batch, 1)
    assert jnp.allclose(q, q_ref, atol=2e-3, rtol=2e-3), (q, q_ref)

    print("KERNEL_OK")
</pallas_src>

<mosaic_0001>
module attributes {stable_mosaic.version = 11 : i64} {
  func.func @_qfunction_kernel(%arg0: i32, %arg1: memref<8x32xf32, #tpu.memory_space<vmem>>, %arg2: memref<8x8xf32, #tpu.memory_space<vmem>>, %arg3: memref<32x128xbf16, #tpu.memory_space<vmem>>, %arg4: memref<8x128xbf16, #tpu.memory_space<vmem>>, %arg5: memref<1x128xf32, #tpu.memory_space<vmem>>, %arg6: memref<128x128xbf16, #tpu.memory_space<vmem>>, %arg7: memref<1x128xf32, #tpu.memory_space<vmem>>, %arg8: memref<1x128xf32, #tpu.memory_space<vmem>>, %arg9: memref<1x1xf32, #tpu.memory_space<vmem>>, %arg10: memref<1x8xf32, #tpu.memory_space<vmem>>) attributes {dimension_semantics = [#tpu.dimension_semantics<parallel>], iteration_bounds = array<i64: 1>, scalar_prefetch = 0 : i64, scratch_operands = 0 : i64, tpu.core_type = #tpu.core_type<tc>, window_params = [{transform_indices = @transform_0, window_bounds = array<i64: 8, 32>}, {transform_indices = @transform_1, window_bounds = array<i64: 8, 8>}, {pipeline_mode = #tpu.pipeline_mode<synchronous>, transform_indices = @transform_2, window_bounds = array<i64: 32, 128>}, {pipeline_mode = #tpu.pipeline_mode<synchronous>, transform_indices = @transform_3, window_bounds = array<i64: 8, 128>}, {pipeline_mode = #tpu.pipeline_mode<synchronous>, transform_indices = @transform_4, window_bounds = array<i64: 1, 128>}, {pipeline_mode = #tpu.pipeline_mode<synchronous>, transform_indices = @transform_5, window_bounds = array<i64: 128, 128>}, {pipeline_mode = #tpu.pipeline_mode<synchronous>, transform_indices = @transform_6, window_bounds = array<i64: 1, 128>}, {pipeline_mode = #tpu.pipeline_mode<synchronous>, transform_indices = @transform_7, window_bounds = array<i64: 1, 128>}, {pipeline_mode = #tpu.pipeline_mode<synchronous>, transform_indices = @transform_8, window_bounds = array<i64: 1, 1>}, {transform_indices = @transform_9, window_bounds = array<i64: 1, 8>}]} {
    %c0 = arith.constant 0 : index
    %c0_0 = arith.constant 0 : index
    %0 = vector.load %arg1[%c0, %c0_0] : memref<8x32xf32, #tpu.memory_space<vmem>>, vector<8x32xf32>
    %1 = arith.truncf %0 : vector<8x32xf32> to vector<8x32xbf16>
    %c0_1 = arith.constant 0 : index
    %c0_2 = arith.constant 0 : index
    %2 = vector.load %arg3[%c0_1, %c0_2] : memref<32x128xbf16, #tpu.memory_space<vmem>>, vector<32x128xbf16>
    %cst = arith.constant dense<0.000000e+00> : vector<8x128xf32>
    %3 = tpu.matmul %1, %2, %cst {dimension_numbers = #tpu.dot_dimension_numbers<[1], [0], [0], [1], [0, 0, 1, 1], [], []>} : vector<8x32xbf16>, vector<32x128xbf16>, vector<8x128xf32> -> vector<8x128xf32>
    %c0_3 = arith.constant 0 : index
    %c0_4 = arith.constant 0 : index
    %4 = vector.load %arg2[%c0_3, %c0_4] : memref<8x8xf32, #tpu.memory_space<vmem>>, vector<8x8xf32>
    %5 = arith.truncf %4 : vector<8x8xf32> to vector<8x8xbf16>
    %c0_5 = arith.constant 0 : index
    %c0_6 = arith.constant 0 : index
    %6 = vector.load %arg4[%c0_5, %c0_6] : memref<8x128xbf16, #tpu.memory_space<vmem>>, vector<8x128xbf16>
    %cst_7 = arith.constant dense<0.000000e+00> : vector<8x128xf32>
    %7 = tpu.matmul %5, %6, %cst_7 {dimension_numbers = #tpu.dot_dimension_numbers<[1], [0], [0], [1], [0, 0, 1, 1], [], []>} : vector<8x8xbf16>, vector<8x128xbf16>, vector<8x128xf32> -> vector<8x128xf32>
    %8 = arith.addf %3, %7 : vector<8x128xf32>
    %c0_8 = arith.constant 0 : index
    %c0_9 = arith.constant 0 : index
    %9 = vector.load %arg5[%c0_8, %c0_9] : memref<1x128xf32, #tpu.memory_space<vmem>>, vector<1x128xf32>
    %10 = vector.broadcast %9 : vector<1x128xf32> to vector<8x128xf32>
    %11 = arith.addf %8, %10 : vector<8x128xf32>
    %cst_10 = arith.constant 0.000000e+00 : f32
    %12 = vector.broadcast %cst_10 : f32 to vector<8x128xf32>
    %13 = arith.maximumf %11, %12 : vector<8x128xf32>
    %14 = arith.truncf %13 : vector<8x128xf32> to vector<8x128xbf16>
    %c0_11 = arith.constant 0 : index
    %c0_12 = arith.constant 0 : index
    %15 = vector.load %arg6[%c0_11, %c0_12] : memref<128x128xbf16, #tpu.memory_space<vmem>>, vector<128x128xbf16>
    %cst_13 = arith.constant dense<0.000000e+00> : vector<8x128xf32>
    %16 = tpu.matmul %14, %15, %cst_13 {dimension_numbers = #tpu.dot_dimension_numbers<[1], [0], [0], [1], [0, 0, 1, 1], [], []>} : vector<8x128xbf16>, vector<128x128xbf16>, vector<8x128xf32> -> vector<8x128xf32>
    %c0_14 = arith.constant 0 : index
    %c0_15 = arith.constant 0 : index
    %17 = vector.load %arg7[%c0_14, %c0_15] : memref<1x128xf32, #tpu.memory_space<vmem>>, vector<1x128xf32>
    %18 = vector.broadcast %17 : vector<1x128xf32> to vector<8x128xf32>
    %19 = arith.addf %16, %18 : vector<8x128xf32>
    %cst_16 = arith.constant 0.000000e+00 : f32
    %20 = vector.broadcast %cst_16 : f32 to vector<8x128xf32>
    %21 = arith.maximumf %19, %20 : vector<8x128xf32>
    %c0_17 = arith.constant 0 : index
    %c0_18 = arith.constant 0 : index
    %22 = vector.load %arg8[%c0_17, %c0_18] : memref<1x128xf32, #tpu.memory_space<vmem>>, vector<1x128xf32>
    %23 = vector.broadcast %22 : vector<1x128xf32> to vector<8x128xf32>
    %24 = arith.mulf %21, %23 : vector<8x128xf32>
    %cst_19 = arith.constant dense<0.000000e+00> : vector<8xf32>
    %25 = vector.multi_reduction <add>, %24, %cst_19 [1] : vector<8x128xf32> to vector<8xf32>
    %26 = vector.shape_cast %25 : vector<8xf32> to vector<8x1xf32>
    %c0_20 = arith.constant 0 : index
    %c0_21 = arith.constant 0 : index
    %27 = vector.load %arg9[%c0_20, %c0_21] : memref<1x1xf32, #tpu.memory_space<vmem>>, vector<1x1xf32>
    %28 = vector.broadcast %27 : vector<1x1xf32> to vector<8x1xf32>
    %29 = arith.addf %26, %28 : vector<8x1xf32>
    %30 = tpu.transpose %29, [1, 0] : vector<8x1xf32> -> vector<1x8xf32>
    %c0_22 = arith.constant 0 : index
    %c0_23 = arith.constant 0 : index
    %31 = vector.load %arg10[%c0_22, %c0_23] : memref<1x8xf32, #tpu.memory_space<vmem>>, vector<1x8xf32>
    tpu.vector_store %arg10[%c0_22, %c0_23], %30 {strides = array<i32>} : memref<1x8xf32, #tpu.memory_space<vmem>>, vector<1x8xf32>,
    return
  }
  func.func @transform_0(%arg0: i32) -> (i32, i32) {
    %c0_i32 = arith.constant 0 : i32
    %c0_i32_0 = arith.constant 0 : i32
    return %arg0, %c0_i32 : i32, i32
  }
  func.func @transform_1(%arg0: i32) -> (i32, i32) {
    %c0_i32 = arith.constant 0 : i32
    %c0_i32_0 = arith.constant 0 : i32
    return %arg0, %c0_i32 : i32, i32
  }
  func.func @transform_2(%arg0: i32) -> (i32, i32) {
    %c0_i32 = arith.constant 0 : i32
    %c0_i32_0 = arith.constant 0 : i32
    %c0_i32_1 = arith.constant 0 : i32
    return %c0_i32, %c0_i32_0 : i32, i32
  }
  func.func @transform_3(%arg0: i32) -> (i32, i32) {
    %c0_i32 = arith.constant 0 : i32
    %c0_i32_0 = arith.constant 0 : i32
    %c0_i32_1 = arith.constant 0 : i32
    return %c0_i32, %c0_i32_0 : i32, i32
  }
  func.func @transform_4(%arg0: i32) -> (i32, i32) {
    %c0_i32 = arith.constant 0 : i32
    %c0_i32_0 = arith.constant 0 : i32
    %c0_i32_1 = arith.constant 0 : i32
    return %c0_i32, %c0_i32_0 : i32, i32
  }
  func.func @transform_5(%arg0: i32) -> (i32, i32) {
    %c0_i32 = arith.constant 0 : i32
    %c0_i32_0 = arith.constant 0 : i32
    %c0_i32_1 = arith.constant 0 : i32
    return %c0_i32, %c0_i32_0 : i32, i32
  }
  func.func @transform_6(%arg0: i32) -> (i32, i32) {
    %c0_i32 = arith.constant 0 : i32
    %c0_i32_0 = arith.constant 0 : i32
    %c0_i32_1 = arith.constant 0 : i32
    return %c0_i32, %c0_i32_0 : i32, i32
  }
  func.func @transform_7(%arg0: i32) -> (i32, i32) {
    %c0_i32 = arith.constant 0 : i32
    %c0_i32_0 = arith.constant 0 : i32
    %c0_i32_1 = arith.constant 0 : i32
    return %c0_i32, %c0_i32_0 : i32, i32
  }
  func.func @transform_8(%arg0: i32) -> (i32, i32) {
    %c0_i32 = arith.constant 0 : i32
    %c0_i32_0 = arith.constant 0 : i32
    %c0_i32_1 = arith.constant 0 : i32
    return %c0_i32, %c0_i32_0 : i32, i32
  }
  func.func @transform_9(%arg0: i32) -> (i32, i32) {
    %c0_i32 = arith.constant 0 : i32
    %c0_i32_0 = arith.constant 0 : i32
    return %arg0, %c0_i32 : i32, i32
  }
}

</mosaic_0001>

<llo_original>
// kernel: tpu_custom_call.1
$region0: #{tpu_custom_call.1}
  #allocation0 [shape = 'u32[]', space=smem, size = 0x4, offset = 0x4, fixed_abs, tag = 'smem constant byte address 0x4 - core index']
  #allocation1 [shape = 'u32[144,128]{1,0:T(1,128)}', space=vmem, size = 0x12000, scoped, tag = 'internal scratch']
  #allocation2 [shape = 'f32[1,1]{1,0:T(1,128)S(1)}', space=vmem, size = 0x200, scoped, tag = 'scoped memory for tpu_custom_call.1']
  %s0 = inlined_call_operand.vmem [shape: f32[2,32], index: 0, kind: input, shape index: {}]
  %s1 = inlined_call_operand.hbm [shape: f32[2,8], index: 1, kind: input, shape index: {}]
  %s2 = inlined_call_operand.hbm [shape: bf16[32,128], index: 2, kind: input, shape index: {}]
  %s3 = inlined_call_operand.vmem [shape: bf16[8,128], index: 3, kind: input, shape index: {}]
  %s4 = inlined_call_operand.vmem [shape: f32[1,128], index: 4, kind: input, shape index: {}]
  %s5 = inlined_call_operand.hbm [shape: bf16[128,128], index: 5, kind: input, shape index: {}]
  %s6 = inlined_call_operand.vmem [shape: f32[1,128], index: 6, kind: input, shape index: {}]
  %s7 = inlined_call_operand.vmem [shape: f32[1,128], index: 7, kind: input, shape index: {}]
  %s8 = inlined_call_operand.<no memory space> [shape: f32[1,1], index: 8, kind: input, shape index: {}]
  %s9 = inlined_call_operand.hbm [shape: f32[1,8], index: 9, kind: output, shape index: {}]
  %s10 = sld [smem:[#allocation0]]
  $region58: #{tpu_custom_call.1} parent=0
    _
  %s12 = ssub.s32 1, %s10
  %s13 = scalar_select 0, %s12, %s10
  %v14 = vstv %s8
  %15 = vst [vmem:[#allocation2] sm:$0x1] %v14
  $region1: #{tpu_custom_call.1} parent=0
    #allocation3 [shape = 'u8[4096]{0}', space=vmem, size = 0x1000, scoped, tag = 'input window, operand 1, single buffered']
    #allocation4 [shape = 's32[1]{0}', space=sflag, size = 0x4, scoped, tag = 'scoped memory for tpu_custom_call.1']
    #allocation5 [shape = 's32[1]{0}', space=sflag, size = 0x4, scoped, tag = 'scoped memory for tpu_custom_call.1']
    #allocation6 [shape = 'u8[8192]{0}', space=vmem, size = 0x2000, scoped, tag = 'input window, operand 2, single buffered']
    #allocation7 [shape = 's32[1]{0}', space=sflag, size = 0x4, scoped, tag = 'scoped memory for tpu_custom_call.1']
    #allocation8 [shape = 'u8[32768]{0}', space=vmem, size = 0x8000, scoped, tag = 'input window, operand 5, single buffered']
    #allocation9 [shape = 'u8[512]{0}', space=vmem, size = 0x400, scoped, tag = 'output window, operand 0, single buffered']
    %16 = vsyncpa [#allocation4], 0
    %17 = vsyncpa [#allocation7], 0
    %18 = vsyncpa [#allocation5], 0
    // Predicated region
    $region2: #{tpu_custom_call.1} parent=1 // pred_check
      _
    $region3: #{tpu_custom_call.1} parent=1 // pred_check_branch
      %20 = sbr.rel (0) target = $region5
    $region4: #{tpu_custom_call.1} parent=1 // pred_region
      _
    $region5: #{tpu_custom_call.1} parent=1 // pred_fallthru
      _
    // Predicated region
    $region6: #{tpu_custom_call.1} parent=1 // pred_check
      _
    $region7: #{tpu_custom_call.1} parent=1 // pred_check_branch
      %22 = sbr.rel (0) target = $region9
    $region8: #{tpu_custom_call.1} parent=1 // pred_region
      %s24 = ssub.s32 128, 32
      %25 = vsyncadd [#allocation4], %s24
      %s26 = sshll.u32 [#allocation3], 4
      %s27 = int_to_ptr.vmem [resolvable:$true] %s26
      %32 = dma.hbm_to_vmem [thread:$0]  %s1, 32, %s27, [#allocation4], 32, 32, 2
    $region9: #{tpu_custom_call.1} parent=1 // pred_fallthru
      _
    // Predicated region
    $region10: #{tpu_custom_call.1} parent=1 // pred_check
      _
    $region11: #{tpu_custom_call.1} parent=1 // pred_check_branch
      %34 = sbr.rel (0) target = $region13
    $region12: #{tpu_custom_call.1} parent=1 // pred_region
      %s36 = ssub.s32 256, 256
      %37 = vsyncadd [#allocation7], %s36
      %s38 = sshll.u32 [#allocation6], 4
      %s39 = int_to_ptr.vmem [resolvable:$true] %s38
      %44 = dma.hbm_to_vmem [thread:$0]  %s2, 256, %s39, [#allocation7], 64, 64, 4
    $region13: #{tpu_custom_call.1} parent=1 // pred_fallthru
      _
    // Predicated region
    $region14: #{tpu_custom_call.1} parent=1 // pred_check
      _
    $region15: #{tpu_custom_call.1} parent=1 // pred_check_branch
      %46 = sbr.rel (0) target = $region17
    $region16: #{tpu_custom_call.1} parent=1 // pred_region
      _
    $region17: #{tpu_custom_call.1} parent=1 // pred_fallthru
      _
    // Predicated region
    $region18: #{tpu_custom_call.1} parent=1 // pred_check
      _
    $region19: #{tpu_custom_call.1} parent=1 // pred_check_branch
      %48 = sbr.rel (0) target = $region21
    $region20: #{tpu_custom_call.1} parent=1 // pred_region
      _
    $region21: #{tpu_custom_call.1} parent=1 // pred_fallthru
      _
    // Predicated region
    $region22: #{tpu_custom_call.1} parent=1 // pred_check
      _
    $region23: #{tpu_custom_call.1} parent=1 // pred_check_branch
      %50 = sbr.rel (0) target = $region25
    $region24: #{tpu_custom_call.1} parent=1 // pred_region
      %s52 = ssub.s32 1024, 1024
      %53 = vsyncadd [#allocation7], %s52
      %s54 = sshll.u32 [#allocation8], 4
      %s55 = int_to_ptr.vmem [resolvable:$true] %s54
      %60 = dma.hbm_to_vmem [thread:$0]  %s5, 1024, %s55, [#allocation7], 64, 64, 4
    $region25: #{tpu_custom_call.1} parent=1 // pred_fallthru
      _
    // Predicated region
    $region26: #{tpu_custom_call.1} parent=1 // pred_check
      _
    $region27: #{tpu_custom_call.1} parent=1 // pred_check_branch
      %62 = sbr.rel (0) target = $region29
    $region28: #{tpu_custom_call.1} parent=1 // pred_region
      _
    $region29: #{tpu_custom_call.1} parent=1 // pred_fallthru
      _
    // Predicated region
    $region30: #{tpu_custom_call.1} parent=1 // pred_check
      _
    $region31: #{tpu_custom_call.1} parent=1 // pred_check_branch
      %64 = sbr.rel (0) target = $region33
    $region32: #{tpu_custom_call.1} parent=1 // pred_region
      _
    $region33: #{tpu_custom_call.1} parent=1 // pred_fallthru
      _
    // Predicated region
    $region34: #{tpu_custom_call.1} parent=1 // pred_check
      _
    $region35: #{tpu_custom_call.1} parent=1 // pred_check_branch
      %66 = sbr.rel (0) target = $region37
    $region36: #{tpu_custom_call.1} parent=1 // pred_region
      _
    $region37: #{tpu_custom_call.1} parent=1 // pred_fallthru
      _
    // Predicated region
    $region38: #{tpu_custom_call.1} parent=1 // pred_check
      _
    $region39: #{tpu_custom_call.1} parent=1 // pred_check_branch
      %68 = sbr.rel (0) target = $region41
    $region40: #{tpu_custom_call.1} parent=1 // pred_region
      %69 = dma.done [#allocation4], 128
    $region41: #{tpu_custom_call.1} parent=1 // pred_fallthru
      _
    // Predicated region
    $region42: #{tpu_custom_call.1} parent=1 // pred_check
      _
    $region43: #{tpu_custom_call.1} parent=1 // pred_check_branch
      %71 = sbr.rel (0) target = $region45
    $region44: #{tpu_custom_call.1} parent=1 // pred_region
      %72 = dma.done [#allocation7], 256
    $region45: #{tpu_custom_call.1} parent=1 // pred_fallthru
      _
    // Predicated region
    $region46: #{tpu_custom_call.1} parent=1 // pred_check
      _
    $region47: #{tpu_custom_call.1} parent=1 // pred_check_branch
      %74 = sbr.rel (0) target = $region49
    $region48: #{tpu_custom_call.1} parent=1 // pred_region
      %75 = dma.done [#allocation7], 1024
    $region49: #{tpu_custom_call.1} parent=1 // pred_fallthru
      _
    %v77 = vld [vmem:[%s0] sm:$0xff]
    %v78 = vpack.c.bf16 %v77, %v77
    %v79 = vld [vmem:[#allocation6] sm:$0xf]
    %v80 = vld [vmem:[#allocation6 + $0x4] sm:$0xf]
    %v81 = vld [vmem:[#allocation6 + $0x8] sm:$0xf]
    %v82 = vld [vmem:[#allocation6 + $0xc] sm:$0xf]
    %v83 = vld [vmem:[#allocation3] sm:$0xff]
    %v84 = vpack.c.bf16 %v83, %v83
    %v85 = vld [vmem:[%s3] sm:$0xf]
    %vm86 = vcmask 64512
    %v88 = vsel %vm86, %v84, 0
    %vm90 = vcmask 1043456
    %v92 = vsel %vm90, %v85, 0
    %94 = vmatprep.subr.bf16.mxu0 0
    %95 = vmatpush1.bf16.msra.mxu0 0
    %96 = vmatprep.subr.bf16.mxu0 0
    %97 = vmatpush1.bf16.msra.mxu0 0
    %98 = vmatprep.subr.bf16.mxu0 0
    %99 = vmatpush1.bf16.msra.mxu0 0
    %100 = vmatprep.subr.bf16.mxu0 0
    %101 = vmatpush1.bf16.msra.mxu0 0
    %102 = vmatprep.subr.bf16.mxu0 0
    %103 = vmatpush1.bf16.msra.mxu0 0
    %104 = vmatprep.subr.bf16.mxu0 0
    %105 = vmatpush1.bf16.msra.mxu0 0
    %106 = vmatprep.subr.bf16.mxu0 0
    %107 = vmatpush1.bf16.msra.mxu0 0
    %108 = vmatprep.subr.bf16.mxu0 0
    %109 = vmatpush1.bf16.msra.mxu0 %v92
    %110 = vmatprep.subr.bf16.mxu0 0
    %111 = vmatpush2.bf16.msra.mxu0 0
    %112 = vmatprep.subr.bf16.mxu0 0
    %113 = vmatpush2.bf16.msra.mxu0 0
    %114 = vmatprep.subr.bf16.mxu0 0
    %115 = vmatpush2.bf16.msra.mxu0 0
    %116 = vmatprep.subr.bf16.mxu0 0
    %117 = vmatpush2.bf16.msra.mxu0 0
    %118 = vmatprep.subr.bf16.mxu0 0
    %119 = vmatpush2.bf16.msra.mxu0 0
    %120 = vmatprep.subr.bf16.mxu0 0
    %121 = vmatpush2.bf16.msra.mxu0 0
    %122 = vmatprep.subr.bf16.mxu0 0
    %123 = vmatpush2.bf16.msra.mxu0 0
    %124 = vmatprep.subr.bf16.mxu0 0
    %125 = vmatpush2.bf16.msra.mxu0 0
    %126 = vmatprep.mubr.bf16.mxu0 0
    %127 = vmatmul.mubr.bf16.gmra.mxu0 %v88
    %v128 = vpop.f32.mrf.mxu0
    %v129 = vadd.f32 0.0, %v128
    %v130 = vpop.f32.mrf.mxu0
    %v131 = vpop.f32.mrf.mxu0
    %v132 = vpop.f32.mrf.mxu0
    %133 = vdwg.mxu0
    %v138 = vunpack.c.l.b16 %v79
    %v139 = vunpack.c.l.b16 %v80
    %v140 = vunpack.c.l.b16 %v81
    %v141 = vunpack.c.l.b16 %v82
    %v142 = vpack.c.b16 %v139, %v138
    %v143 = vpack.c.b16 %v141, %v140
    %vm146 = vcmask 261120
    %v148 = vsel %vm146, %v78, 0
    %150 = vmatprep.subr.bf16.mxu0 0
    %151 = vmatpush1.bf16.msra.mxu0 0
    %152 = vmatprep.subr.bf16.mxu0 0
    %153 = vmatpush1.bf16.msra.mxu0 0
    %154 = vmatprep.subr.bf16.mxu0 0
    %155 = vmatpush1.bf16.msra.mxu0 0
    %156 = vmatprep.subr.bf16.mxu0 0
    %157 = vmatpush1.bf16.msra.mxu0 0
    %158 = vmatprep.subr.bf16.mxu0 0
    %159 = vmatpush1.bf16.msra.mxu0 0
    %160 = vmatprep.subr.bf16.mxu0 0
    %161 = vmatpush1.bf16.msra.mxu0 0
    %162 = vmatprep.subr.bf16.mxu0 0
    %163 = vmatpush1.bf16.msra.mxu0 %v143
    %164 = vmatprep.subr.bf16.mxu0 0
    %165 = vmatpush1.bf16.msra.mxu0 %v142
    %166 = vmatprep.subr.bf16.mxu0 0
    %167 = vmatpush2.bf16.msra.mxu0 0
    %168 = vmatprep.subr.bf16.mxu0 0
    %169 = vmatpush2.bf16.msra.mxu0 0
    %170 = vmatprep.subr.bf16.mxu0 0
    %171 = vmatpush2.bf16.msra.mxu0 0
    %172 = vmatprep.subr.bf16.mxu0 0
    %173 = vmatpush2.bf16.msra.mxu0 0
    %174 = vmatprep.subr.bf16.mxu0 0
    %175 = vmatpush2.bf16.msra.mxu0 0
    %176 = vmatprep.subr.bf16.mxu0 0
    %177 = vmatpush2.bf16.msra.mxu0 0
    %178 = vmatprep.subr.bf16.mxu0 0
    %179 = vmatpush2.bf16.msra.mxu0 0
    %180 = vmatprep.subr.bf16.mxu0 0
    %181 = vmatpush2.bf16.msra.mxu0 0
    %182 = vmatprep.mubr.bf16.mxu0 0
    %183 = vmatmul.mubr.bf16.gmra.mxu0 %v148
    %v184 = vpop.f32.mrf.mxu0
    %v185 = vadd.f32 %v129, %v184
    %v186 = vpop.f32.mrf.mxu0
    %v187 = vpop.f32.mrf.mxu0
    %v188 = vpop.f32.mrf.mxu0
    %189 = vdwg.mxu0
    %v190 = vld [vmem:[%s4] sm:$0x1]
    %v192 = vlaneseq
    %v193 = vshrl.u32 %v192, 7
    %v194 = vsub.s32 0, %v193
    %v195 = vrot.slane %v190, %v194
    %v197 = vadd.f32 %v185, %v195
    %v198 = vmax.f32 %v197, 0.0
    %v199 = vpack.c.bf16 %v198, %v198
    %v200 = vld [vmem:[#allocation8] sm:$0xf]
    %v201 = vld [vmem:[#allocation8 + $0x4] sm:$0xf]
    %v202 = vld [vmem:[#allocation8 + $0x8] sm:$0xf]
    %v203 = vld [vmem:[#allocation8 + $0xc] sm:$0xf]
    %v204 = vld [vmem:[#allocation8 + $0x10] sm:$0xf]
    %v205 = vld [vmem:[#allocation8 + $0x14] sm:$0xf]
    %v206 = vld [vmem:[#allocation8 + $0x18] sm:$0xf]
    %v207 = vld [vmem:[#allocation8 + $0x1c] sm:$0xf]
    %v208 = vld [vmem:[#allocation8 + $0x20] sm:$0xf]
    %v209 = vld [vmem:[#allocation8 + $0x24] sm:$0xf]
    %v210 = vld [vmem:[#allocation8 + $0x28] sm:$0xf]
    %v211 = vld [vmem:[#allocation8 + $0x2c] sm:$0xf]
    %v212 = vld [vmem:[#allocation8 + $0x30] sm:$0xf]
    %v213 = vld [vmem:[#allocation8 + $0x34] sm:$0xf]
    %v214 = vld [vmem:[#allocation8 + $0x38] sm:$0xf]
    %v215 = vld [vmem:[#allocation8 + $0x3c] sm:$0xf]
    %v216 = vld [vmem:[%s6] sm:$0x1]
    %v218 = vlaneseq
    %v219 = vshrl.u32 %v218, 7
    %v220 = vsub.s32 0, %v219
    %v221 = vrot.slane %v216, %v220
    %v239 = vunpack.c.l.b16 %v200
    %v240 = vunpack.c.l.b16 %v201
    %v241 = vunpack.c.l.b16 %v202
    %v242 = vunpack.c.l.b16 %v203
    %v243 = vunpack.c.l.b16 %v204
    %v244 = vunpack.c.l.b16 %v205
    %v245 = vunpack.c.l.b16 %v206
    %v246 = vunpack.c.l.b16 %v207
    %v247 = vunpack.c.l.b16 %v208
    %v248 = vunpack.c.l.b16 %v209
    %v249 = vunpack.c.l.b16 %v210
    %v250 = vunpack.c.l.b16 %v211
    %v251 = vunpack.c.l.b16 %v212
    %v252 = vunpack.c.l.b16 %v213
    %v253 = vunpack.c.l.b16 %v214
    %v254 = vunpack.c.l.b16 %v215
    %v255 = vpack.c.b16 %v240, %v239
    %v256 = vpack.c.b16 %v242, %v241
    %v257 = vpack.c.b16 %v244, %v243
    %v258 = vpack.c.b16 %v246, %v245
    %v259 = vpack.c.b16 %v248, %v247
    %v260 = vpack.c.b16 %v250, %v249
    %v261 = vpack.c.b16 %v252, %v251
    %v262 = vpack.c.b16 %v254, %v253
    %271 = vmatprep.subr.bf16.mxu0 0
    %272 = vmatpush1.bf16.msra.mxu0 %v262
    %273 = vmatprep.subr.bf16.mxu0 0
    %274 = vmatpush1.bf16.msra.mxu0 %v261
    %275 = vmatprep.subr.bf16.mxu0 0
    %276 = vmatpush1.bf16.msra.mxu0 %v260
    %277 = vmatprep.subr.bf16.mxu0 0
    %278 = vmatpush1.bf16.msra.mxu0 %v259
    %279 = vmatprep.subr.bf16.mxu0 0
    %280 = vmatpush1.bf16.msra.mxu0 %v258
    %281 = vmatprep.subr.bf16.mxu0 0
    %282 = vmatpush1.bf16.msra.mxu0 %v257
    %283 = vmatprep.subr.bf16.mxu0 0
    %284 = vmatpush1.bf16.msra.mxu0 %v256
    %285 = vmatprep.subr.bf16.mxu0 0
    %286 = vmatpush1.bf16.msra.mxu0 %v255
    %287 = vmatprep.subr.bf16.mxu0 0
    %288 = vmatpush2.bf16.msra.mxu0 0
    %289 = vmatprep.subr.bf16.mxu0 0
    %290 = vmatpush2.bf16.msra.mxu0 0
    %291 = vmatprep.subr.bf16.mxu0 0
    %292 = vmatpush2.bf16.msra.mxu0 0
    %293 = vmatprep.subr.bf16.mxu0 0
    %294 = vmatpush2.bf16.msra.mxu0 0
    %295 = vmatprep.subr.bf16.mxu0 0
    %296 = vmatpush2.bf16.msra.mxu0 0
    %297 = vmatprep.subr.bf16.mxu0 0
    %298 = vmatpush2.bf16.msra.mxu0 0
    %299 = vmatprep.subr.bf16.mxu0 0
    %300 = vmatpush2.bf16.msra.mxu0 0
    %301 = vmatprep.subr.bf16.mxu0 0
    %302 = vmatpush2.bf16.msra.mxu0 0
    %303 = vmatprep.mubr.bf16.mxu0 0
    %304 = vmatmul.mubr.bf16.gmra.mxu0 %v199
    %v305 = vpop.f32.mrf.mxu0
    %v306 = vadd.f32 %v221, %v305
    %v307 = vpop.f32.mrf.mxu0
    %v308 = vpop.f32.mrf.mxu0
    %v309 = vpop.f32.mrf.mxu0
    %310 = vdwg.mxu0
    %v311 = vmax.f32 %v306, 0.0
    %v312 = vld [vmem:[%s7] sm:$0x1]
    %v314 = vlaneseq
    %v315 = vshrl.u32 %v314, 7
    %v316 = vsub.s32 0, %v315
    %v317 = vrot.slane %v312, %v316
    %v319 = vmul.f32 %v311, %v317
    %320 = vadd.xlane.f32.xlu0 %v319
    %v321 = vpop.xlane.xlu0 %320
    %v322 = vld [vmem:[#allocation2] sm:$0x1]
    %v324 = vlaneseq
    %v325 = vshrl.u32 %v324, 7
    %v326 = vsub.s32 0, %v325
    %v327 = vrot.slane %v322, %v326
    %v329 = vadd.f32 %v321, %v327
    %330 = vxpose.xlu0.b32.start [1/16] %v329, 128
    %331 = vxpose.xlu0.b32.cont [2/16] 0.0, 128
    %332 = vxpose.xlu0.b32.cont [3/16] 0.0, 128
    %333 = vxpose.xlu0.b32.cont [4/16] 0.0, 128
    %334 = vxpose.xlu0.b32.cont [5/16] 0.0, 128
    %335 = vxpose.xlu0.b32.cont [6/16] 0.0, 128
    %336 = vxpose.xlu0.b32.cont [7/16] 0.0, 128
    %337 = vxpose.xlu0.b32.cont [8/16] 0.0, 128
    %338 = vxpose.xlu0.b32.cont [9/16] 0.0, 128
    %339 = vxpose.xlu0.b32.cont [10/16] 0.0, 128
    %340 = vxpose.xlu0.b32.cont [11/16] 0.0, 128
    %341 = vxpose.xlu0.b32.cont [12/16] 0.0, 128
    %342 = vxpose.xlu0.b32.cont [13/16] 0.0, 128
    %343 = vxpose.xlu0.b32.cont [14/16] 0.0, 128
    %344 = vxpose.xlu0.b32.cont [15/16] 0.0, 128
    %345 = vxpose.xlu0.b32.end [16/16] 0.0, 128
    %v346 = vpop.trf.xlu0
    %v347 = vpop.trf.xlu0
    %v348 = vpop.trf.xlu0
    %v349 = vpop.trf.xlu0
    %v350 = vpop.trf.xlu0
    %v351 = vpop.trf.xlu0
    %v352 = vpop.trf.xlu0
    %v353 = vpop.trf.xlu0
    %v354 = vpop.trf.xlu0
    %v355 = vpop.trf.xlu0
    %v356 = vpop.trf.xlu0
    %v357 = vpop.trf.xlu0
    %v358 = vpop.trf.xlu0
    %v359 = vpop.trf.xlu0
    %v360 = vpop.trf.xlu0
    %v361 = vpop.trf.xlu0
    %vm362 = vcmask 57344
    %363 = vst.msk [vmem:[#allocation9] sm:$0x1] %vm362, %v346
    // Predicated region
    $region50: #{tpu_custom_call.1} parent=1 // pred_check
      _
    $region51: #{tpu_custom_call.1} parent=1 // pred_check_branch
      %365 = sbr.rel (0) target = $region53
    $region52: #{tpu_custom_call.1} parent=1 // pred_region
      %s367 = ssub.s32 16, 16
      %368 = vsyncadd [#allocation5], %s367
      %s370 = sshll.u32 [#allocation9], 4
      %s371 = int_to_ptr.vmem [resolvable:$true] %s370
      %373 = dma.vmem_to_hbm [thread:$0]  %s371, 16, %s9, [#allocation5]
    $region53: #{tpu_custom_call.1} parent=1 // pred_fallthru
      _
    // Predicated region
    $region54: #{tpu_custom_call.1} parent=1 // pred_check
      _
    $region55: #{tpu_custom_call.1} parent=1 // pred_check_branch
      %375 = sbr.rel (0) target = $region57
    $region56: #{tpu_custom_call.1} parent=1 // pred_region
      %376 = dma.done [#allocation5], 16
    $region57: #{tpu_custom_call.1} parent=1 // pred_fallthru
      _
    %377 = vsyncpa [#allocation4], 1
    %378 = vsyncpa [#allocation7], 1
    %379 = vsyncpa [#allocation5], 1

</llo_original>
